<compile_context>
chip_gen: v7x
topology: tpu7x:2x2x1
jax: 0.10.0
libtpu: 0.0.40
codegen_flags: <defaults>
</compile_context>

<pallas_src>
import jax
import jax.numpy as jnp
from jax import lax
from jax.experimental import pallas as pl
from jax.experimental.pallas import tpu as pltpu


_MAX_BATCH_TILE = 256   # resident path: output rows per grid step (mult. of 8)
_LOC_CHUNK = 512        # resident path: one-hot matmul chunk along num_loc
_STREAM_TILE = 32       # streaming path: rows per tile (=> 2*32 DMA sems)


def _round_up(x: int, m: int) -> int:
    return (x + m - 1) // m * m


def _vmem_budget_bytes() -> int:
    """Conservative per-TensorCore VMEM budget (v5e/v6e 128 MiB, v7x 64 MiB)."""
    try:
        cap = int(pltpu.get_tpu_info().vmem_capacity_bytes)
    except Exception:
        cap = 64 * 1024 * 1024  # assume the smallest (v7x per-TensorCore)
    return int(cap * 0.75)


# --------------------------------------------------------------------------
# Kernels
# --------------------------------------------------------------------------
def _resident_gather_kernel(idx_ref, table_ref, out_ref):
    """Table resident in VMEM; gather TB rows per grid step with a one-hot
    MXU matmul (chunked over num_loc to bound vreg/VMEM pressure).

    idx_ref  : (TB, 1)  int32  -- this tile's indices
    table_ref: (num_loc, D)    -- whole table, resident across the grid
    out_ref  : (TB, D)
    """
    tb = out_ref.shape[0]
    num_loc = table_ref.shape[0]
    idx_col = idx_ref[...]                                     # (TB, 1)

    acc = jnp.zeros(out_ref.shape, jnp.float32)
    for start in range(0, num_loc, _LOC_CHUNK):
        size = min(_LOC_CHUNK, num_loc - start)
        iota = start + lax.broadcasted_iota(jnp.int32, (tb, size), 1)
        onehot = (idx_col == iota).astype(table_ref.dtype)     # one 1.0 / row
        acc = acc + jnp.dot(
            onehot,
            table_ref[pl.ds(start, size), :],
            preferred_element_type=jnp.float32,
            precision=lax.Precision.HIGHEST,                   # exact gather
        )
    out_ref[...] = acc.astype(out_ref.dtype)


def _streaming_gather_kernel(idx_smem, table_hbm, out_ref, buf, sems):
    """Large-table fallback: manual row-DMA gather, double-buffered per tile.

    idx_smem : (B_pad,) int32 scalar-prefetched indices (SMEM)
    table_hbm: (num_loc, D) table left in HBM (memory_space=pl.ANY)
    out_ref  : (TS, D) output tile
    buf      : (2*TS, D) VMEM scratch (two tile slots)
    sems     : (2*TS,) DMA semaphores (one per in-flight row)
    """
    ts = out_ref.shape[0]
    step = pl.program_id(0)
    n_steps = pl.num_programs(0)
    slot = step % 2

    def row_copy(tile, r, slot_):
        row = idx_smem[tile * ts + r]
        return pltpu.make_async_copy(
            table_hbm.at[pl.ds(row, 1), :],
            buf.at[pl.ds(slot_ * ts + r, 1), :],
            sems.at[slot_ * ts + r],
        )

    def issue_tile(tile, slot_):
        for r in range(ts):                       # many outstanding row DMAs
            row_copy(tile, r, slot_).start()

    @pl.when(step == 0)
    def _():
        issue_tile(0, 0)                          # prime slot 0

    @pl.when(step + 1 < n_steps)
    def _():
        issue_tile(step + 1, 1 - slot)            # prefetch next tile

    for r in range(ts):                           # wait current tile's rows
        row_copy(step, r, slot).wait()

    off = pl.multiple_of(slot * ts, 8)
    out_ref[...] = buf[pl.ds(off, ts), :]         # dense (TS, D) writeback


# --------------------------------------------------------------------------
# Wrappers
# --------------------------------------------------------------------------
def _resident_lookup(table, idx, batch, tb, vmem_limit):
    num_loc, emb_dim = table.shape
    b_pad = _round_up(batch, tb)
    idx_p = idx if b_pad == batch else jnp.pad(idx, (0, b_pad - batch))
    idx2d = idx_p.reshape(b_pad, 1)

    def call(table_spec):
        return pl.pallas_call(
            _resident_gather_kernel,
            out_shape=jax.ShapeDtypeStruct((b_pad, emb_dim), table.dtype),
            grid=(b_pad // tb,),
            in_specs=[pl.BlockSpec((tb, 1), lambda i: (i, 0)), table_spec],
            out_specs=pl.BlockSpec((tb, emb_dim), lambda i: (i, 0)),
            compiler_params=pltpu.CompilerParams(
                dimension_semantics=("parallel",),
                vmem_limit_bytes=vmem_limit,   # always set (v5e default: 16 MiB)
            ),
        )(idx2d, table)

    try:
        # Constant block index => never re-fetched; single-buffer the table.
        out = call(pl.BlockSpec((num_loc, emb_dim), lambda i: (0, 0),
                                pipeline_mode=pl.Buffered(1)))
    except Exception:
        # Fallback for Pallas versions without per-BlockSpec buffering control.
        out = call(pl.BlockSpec((num_loc, emb_dim), lambda i: (0, 0)))
    return out[:batch]


def _streaming_lookup(table, idx, batch):
    num_loc, emb_dim = table.shape
    ts = min(_STREAM_TILE, _round_up(batch, 8))
    b_pad = _round_up(batch, ts)                  # round to the small tile only
    idx_p = idx if b_pad == batch else jnp.pad(idx, (0, b_pad - batch))

    grid_spec = pltpu.PrefetchScalarGridSpec(
        num_scalar_prefetch=1,
        grid=(b_pad // ts,),
        in_specs=[pl.BlockSpec(memory_space=pl.ANY)],          # table stays in HBM
        out_specs=pl.BlockSpec((ts, emb_dim), lambda i, idx_sref: (i, 0)),
        scratch_shapes=[
            pltpu.VMEM((2 * ts, emb_dim), table.dtype),        # double buffer
            pltpu.SemaphoreType.DMA((2 * ts,)),                # per-row sems
        ],
    )
    out = pl.pallas_call(
        _streaming_gather_kernel,
        out_shape=jax.ShapeDtypeStruct((b_pad, emb_dim), table.dtype),
        grid_spec=grid_spec,
        compiler_params=pltpu.CompilerParams(
            # Manual cross-step double buffering requires sequential steps.
            dimension_semantics=("arbitrary",),
        ),
    )(idx_p, table)
    return out[:batch]


def embedding_lookup(table, idx, *, force_streaming=False):
    """table: (num_location, D) float; idx: (B,) int -> (B, D) gathered rows."""
    num_loc, emb_dim = table.shape
    batch = int(idx.shape[0])

    # Bounds safety (torch would raise; we clamp so no DMA can go OOB).
    idx = jnp.clip(idx.astype(jnp.int32), 0, num_loc - 1)

    itemsize = jnp.dtype(table.dtype).itemsize
    d_lanes = _round_up(emb_dim, 128)   # lane footprint in VMEM (internal pad)
    loc_pad = _round_up(num_loc, 8)

    # Batch tile: multiple of 8, capped at 256, shrunk for very wide D so the
    # double-buffered output tiles stay <= ~4 MiB (v7x: 64 MiB per core).
    tb = min(_MAX_BATCH_TILE, _round_up(batch, 8))
    while tb > 8 and 2 * tb * d_lanes * itemsize > (4 << 20):
        tb //= 2
    tb = max(8, (tb // 8) * 8)

    # Residency estimate: single-buffered table + double-buffered idx/out
    # tiles + in-kernel one-hot / accumulator scratch + slack.
    table_bytes = loc_pad * d_lanes * itemsize
    io_bytes = 2 * tb * d_lanes * itemsize + 2 * tb * 128 * 4
    scratch_bytes = 2 * tb * _LOC_CHUNK * 4 + tb * d_lanes * 4
    vmem_needed = table_bytes + io_bytes + scratch_bytes + (2 << 20)

    budget = _vmem_budget_bytes()
    resident = (not force_streaming) and vmem_needed <= budget

    if resident:
        vmem_limit = int(min(max(vmem_needed + (4 << 20), 32 << 20), budget))
        return _resident_lookup(table, idx, batch, tb, vmem_limit)
    return _streaming_lookup(table, idx, batch)


class UserDB:
    """JAX/Pallas port of the PyTorch `userDB` module (forward pass only)."""

    def __init__(self, config, key):
        self.num_location = config["num_location"]
        self.embedding_dim = config["embedding_dim"]
        # torch.nn.Embedding default init: N(0, 1).
        self.embedding_location = jax.random.normal(
            key, (self.num_location, self.embedding_dim), dtype=jnp.float32)

    def __call__(self, x):
        # x: (B, num_features) integer tensor; only column 0 is used.
        return embedding_lookup(self.embedding_location, x[:, 0])


if __name__ == "__main__":
    key = jax.random.PRNGKey(0)
    k_tab, k_idx, k_tab2, k_idx2, k_idx3 = jax.random.split(key, 5)

    # 1) demo config matching the PyTorch module usage (VMEM-resident path).
    config = {"num_location": 64, "embedding_dim": 128}
    model = UserDB(config, k_tab)
    batch, num_features = 8, 3
    x = jax.random.randint(k_idx, (batch, num_features), 0,
                           config["num_location"], dtype=jnp.int32)
    out = jax.block_until_ready(model(x))
    ref = model.embedding_location[x[:, 0]]
    assert out.shape == (batch, config["embedding_dim"])
    assert out.dtype == jnp.float32
    assert jnp.allclose(out, ref, atol=1e-5, rtol=1e-5), "resident gather mismatch"

    # 2) non-multiple-of-128 embedding dim (64) and ragged batch (20): still
    #    resident, exercises full-dim blocks and num_loc chunking (4096/512).
    config2 = {"num_location": 4096, "embedding_dim": 64}
    model2 = UserDB(config2, k_tab2)
    x2 = jax.random.randint(k_idx2, (20, num_features), 0,
                            config2["num_location"], dtype=jnp.int32)
    out2 = jax.block_until_ready(model2(x2))
    ref2 = model2.embedding_location[x2[:, 0]]
    assert out2.shape == (20, config2["embedding_dim"])
    assert jnp.allclose(out2, ref2, atol=1e-5, rtol=1e-5), \
        "resident gather mismatch (ragged batch / narrow D)"

    # 3) exercise the large-table streaming path (manual double-buffered DMA
    #    gather) on small shapes by forcing it; ragged batch of 40.
    x3 = jax.random.randint(k_idx3, (40, num_features), 0,
                            config["num_location"], dtype=jnp.int32)
    out3 = jax.block_until_ready(
        embedding_lookup(model.embedding_location, x3[:, 0],
                         force_streaming=True))
    ref3 = model.embedding_location[x3[:, 0]]
    assert out3.shape == (40, config["embedding_dim"])
    assert jnp.allclose(out3, ref3), "streaming gather mismatch"

    print("KERNEL_OK")
</pallas_src>

<mosaic_0001>
module attributes {stable_mosaic.version = 11 : i64} {
  func.func @_resident_gather_kernel(%arg0: i32, %arg1: memref<8x1xi32, #tpu.memory_space<vmem>>, %arg2: memref<64x128xf32, #tpu.memory_space<vmem>>, %arg3: memref<8x128xf32, #tpu.memory_space<vmem>>) attributes {dimension_semantics = [#tpu.dimension_semantics<parallel>], iteration_bounds = array<i64: 1>, scalar_prefetch = 0 : i64, scratch_operands = 0 : i64, tpu.core_type = #tpu.core_type<tc>, window_params = [{transform_indices = @transform_0, window_bounds = array<i64: 8, 1>}, {pipeline_mode = #tpu.pipeline_mode<synchronous>, transform_indices = @transform_1, window_bounds = array<i64: 64, 128>}, {transform_indices = @transform_2, window_bounds = array<i64: 8, 128>}]} {
    %c0 = arith.constant 0 : index
    %c0_0 = arith.constant 0 : index
    %0 = vector.load %arg1[%c0, %c0_0] : memref<8x1xi32, #tpu.memory_space<vmem>>, vector<8x1xi32>
    %cst = arith.constant 0.000000e+00 : f32
    %1 = vector.broadcast %cst : f32 to vector<8x128xf32>
    %2 = tpu.iota {dimensions = array<i32: 1>} : vector<8x64xi32>
    %c0_i32 = arith.constant 0 : i32
    %3 = vector.broadcast %c0_i32 : i32 to vector<8x64xi32>
    %4 = arith.addi %3, %2 : vector<8x64xi32>
    %5 = vector.broadcast %0 : vector<8x1xi32> to vector<8x64xi32>
    %6 = arith.cmpi eq, %5, %4 : vector<8x64xi32>
    %7 = arith.extui %6 : vector<8x64xi1> to vector<8x64xi32>
    %8 = arith.sitofp %7 : vector<8x64xi32> to vector<8x64xf32>
    %c0_1 = arith.constant 0 : index
    %c0_2 = arith.constant 0 : index
    %9 = vector.load %arg2[%c0_1, %c0_2] : memref<64x128xf32, #tpu.memory_space<vmem>>, vector<64x128xf32>
    %cst_3 = arith.constant dense<0.000000e+00> : vector<8x128xf32>
    %10 = tpu.matmul %8, %9, %cst_3 {dimension_numbers = #tpu.dot_dimension_numbers<[1], [0], [0], [1], [0, 0, 1, 1], [], []>, precision = #tpu.contract_precision<fp32>} : vector<8x64xf32>, vector<64x128xf32>, vector<8x128xf32> -> vector<8x128xf32>
    %11 = arith.addf %1, %10 : vector<8x128xf32>
    %c0_4 = arith.constant 0 : index
    %c0_5 = arith.constant 0 : index
    %12 = vector.load %arg3[%c0_4, %c0_5] : memref<8x128xf32, #tpu.memory_space<vmem>>, vector<8x128xf32>
    tpu.vector_store %arg3[%c0_4, %c0_5], %11 {strides = array<i32>} : memref<8x128xf32, #tpu.memory_space<vmem>>, vector<8x128xf32>,
    return
  }
  func.func @transform_0(%arg0: i32) -> (i32, i32) {
    %c0_i32 = arith.constant 0 : i32
    %c0_i32_0 = arith.constant 0 : i32
    return %arg0, %c0_i32 : i32, i32
  }
  func.func @transform_1(%arg0: i32) -> (i32, i32) {
    %c0_i32 = arith.constant 0 : i32
    %c0_i32_0 = arith.constant 0 : i32
    %c0_i32_1 = arith.constant 0 : i32
    return %c0_i32, %c0_i32_0 : i32, i32
  }
  func.func @transform_2(%arg0: i32) -> (i32, i32) {
    %c0_i32 = arith.constant 0 : i32
    %c0_i32_0 = arith.constant 0 : i32
    return %arg0, %c0_i32 : i32, i32
  }
}

module attributes {stable_mosaic.version = 11 : i64} {
  func.func @_resident_gather_kernel(%arg0: i32, %arg1: memref<8x1xi32, #tpu.memory_space<vmem>>, %arg2: memref<64x128xf32, #tpu.memory_space<vmem>>, %arg3: memref<8x128xf32, #tpu.memory_space<vmem>>) attributes {dimension_semantics = [#tpu.dimension_semantics<parallel>], iteration_bounds = array<i64: 1>, scalar_prefetch = 0 : i64, scratch_operands = 0 : i64, tpu.core_type = #tpu.core_type<tc>, window_params = [{transform_indices = @transform_0, window_bounds = array<i64: 8, 1>}, {pipeline_mode = #tpu.pipeline_mode<synchronous>, transform_indices = @transform_1, window_bounds = array<i64: 64, 128>}, {transform_indices = @transform_2, window_bounds = array<i64: 8, 128>}]} {
    %c0 = arith.constant 0 : index
    %c0_0 = arith.constant 0 : index
    %0 = vector.load %arg1[%c0, %c0_0] : memref<8x1xi32, #tpu.memory_space<vmem>>, vector<8x1xi32>
    %cst = arith.constant 0.000000e+00 : f32
    %1 = vector.broadcast %cst : f32 to vector<8x128xf32>
    %2 = tpu.iota {dimensions = array<i32: 1>} : vector<8x64xi32>
    %c0_i32 = arith.constant 0 : i32
    %3 = vector.broadcast %c0_i32 : i32 to vector<8x64xi32>
    %4 = arith.addi %3, %2 : vector<8x64xi32>
    %5 = vector.broadcast %0 : vector<8x1xi32> to vector<8x64xi32>
    %6 = arith.cmpi eq, %5, %4 : vector<8x64xi32>
    %7 = arith.extui %6 : vector<8x64xi1> to vector<8x64xi32>
    %8 = arith.sitofp %7 : vector<8x64xi32> to vector<8x64xf32>
    %c0_1 = arith.constant 0 : index
    %c0_2 = arith.constant 0 : index
    %9 = vector.load %arg2[%c0_1, %c0_2] : memref<64x128xf32, #tpu.memory_space<vmem>>, vector<64x128xf32>
    %cst_3 = arith.constant dense<0.000000e+00> : vector<8x128xf32>
    %10 = tpu.matmul %8, %9, %cst_3 {dimension_numbers = #tpu.dot_dimension_numbers<[1], [0], [0], [1], [0, 0, 1, 1], [], []>, precision = #tpu.contract_precision<fp32>} : vector<8x64xf32>, vector<64x128xf32>, vector<8x128xf32> -> vector<8x128xf32>
    %11 = arith.addf %1, %10 : vector<8x128xf32>
    %c0_4 = arith.constant 0 : index
    %c0_5 = arith.constant 0 : index
    %12 = vector.load %arg3[%c0_4, %c0_5] : memref<8x128xf32, #tpu.memory_space<vmem>>, vector<8x128xf32>
    tpu.vector_store %arg3[%c0_4, %c0_5], %11 {strides = array<i32>} : memref<8x128xf32, #tpu.memory_space<vmem>>, vector<8x128xf32>,
    return
  }
  func.func @transform_0(%arg0: i32) -> (i32, i32) {
    %c0_i32 = arith.constant 0 : i32
    %c0_i32_0 = arith.constant 0 : i32
    return %arg0, %c0_i32 : i32, i32
  }
  func.func @transform_1(%arg0: i32) -> (i32, i32) {
    %c0_i32 = arith.constant 0 : i32
    %c0_i32_0 = arith.constant 0 : i32
    %c0_i32_1 = arith.constant 0 : i32
    return %c0_i32, %c0_i32_0 : i32, i32
  }
  func.func @transform_2(%arg0: i32) -> (i32, i32) {
    %c0_i32 = arith.constant 0 : i32
    %c0_i32_0 = arith.constant 0 : i32
    return %arg0, %c0_i32 : i32, i32
  }
}

</mosaic_0001>

<llo_original>
// kernel: tpu_custom_call.1
$region0: #{tpu_custom_call.1}
  #allocation0 [shape = 'u32[]', space=smem, size = 0x4, offset = 0x4, fixed_abs, tag = 'smem constant byte address 0x4 - core index']
  #allocation1 [shape = 'u32[144,128]{1,0:T(1,128)}', space=vmem, size = 0x12000, scoped, tag = 'internal scratch']
  %s0 = inlined_call_operand.vmem [shape: s32[8,1], index: 0, kind: input, shape index: {}]
  %s1 = inlined_call_operand.hbm [shape: f32[64,128], index: 1, kind: input, shape index: {}]
  %s2 = inlined_call_operand.hbm [shape: f32[8,128], index: 2, kind: output, shape index: {}]
  %s3 = sld [smem:[#allocation0]]
  $region22: #{tpu_custom_call.1} parent=0
    _
  %s5 = ssub.s32 1, %s3
  %s6 = scalar_select 0, %s5, %s3
  $region1: #{tpu_custom_call.1} parent=0
    #allocation2 [shape = 'u8[32768]{0}', space=vmem, size = 0x8000, scoped, tag = 'input window, operand 1, single buffered']
    #allocation3 [shape = 's32[1]{0}', space=sflag, size = 0x4, scoped, tag = 'scoped memory for tpu_custom_call.1']
    #allocation4 [shape = 's32[1]{0}', space=sflag, size = 0x4, scoped, tag = 'scoped memory for tpu_custom_call.1']
    #allocation5 [shape = 'u8[4096]{0}', space=vmem, size = 0x1000, scoped, tag = 'output window, operand 0, single buffered']
    %7 = vsyncpa [#allocation3], 0
    %8 = vsyncpa [#allocation4], 0
    // Predicated region
    $region2: #{tpu_custom_call.1} parent=1 // pred_check
      _
    $region3: #{tpu_custom_call.1} parent=1 // pred_check_branch
      %10 = sbr.rel (0) target = $region5
    $region4: #{tpu_custom_call.1} parent=1 // pred_region
      _
    $region5: #{tpu_custom_call.1} parent=1 // pred_fallthru
      _
    // Predicated region
    $region6: #{tpu_custom_call.1} parent=1 // pred_check
      _
    $region7: #{tpu_custom_call.1} parent=1 // pred_check_branch
      %12 = sbr.rel (0) target = $region9
    $region8: #{tpu_custom_call.1} parent=1 // pred_region
      %s14 = ssub.s32 1024, 1024
      %15 = vsyncadd [#allocation3], %s14
      %s16 = sshll.u32 [#allocation2], 4
      %s17 = int_to_ptr.vmem [resolvable:$true] %s16
      %22 = dma.hbm_to_vmem [thread:$0]  %s1, 1024, %s17, [#allocation3], 128, 128, 8
    $region9: #{tpu_custom_call.1} parent=1 // pred_fallthru
      _
    // Predicated region
    $region10: #{tpu_custom_call.1} parent=1 // pred_check
      _
    $region11: #{tpu_custom_call.1} parent=1 // pred_check_branch
      %24 = sbr.rel (0) target = $region13
    $region12: #{tpu_custom_call.1} parent=1 // pred_region
      %25 = dma.done [#allocation3], 1024
    $region13: #{tpu_custom_call.1} parent=1 // pred_fallthru
      _
    %v26 = vld [vmem:[%s0] sm:$0xff]
    %v27 = vlaneseq
    %v28 = vand.u32 %v27, 127
    %29 = vset.pattern.permute.xlu0 0
    %30 = vperm.xlu0 %29, %v26
    %v31 = vpop.permute.xlu0 %30
    %vm32 = vcmp.eq.s32.totalorder %v31, %v28
    %v33 = vsel %vm32, 1, 0
    %v34 = vcvt.s32.f32 %v33
    %v35 = vld [vmem:[#allocation2] sm:$0xff]
    %v36 = vld [vmem:[#allocation2 + $0x8] sm:$0xff]
    %v37 = vld [vmem:[#allocation2 + $0x10] sm:$0xff]
    %v38 = vld [vmem:[#allocation2 + $0x18] sm:$0xff]
    %v39 = vld [vmem:[#allocation2 + $0x20] sm:$0xff]
    %v40 = vld [vmem:[#allocation2 + $0x28] sm:$0xff]
    %v41 = vld [vmem:[#allocation2 + $0x30] sm:$0xff]
    %v42 = vld [vmem:[#allocation2 + $0x38] sm:$0xff]
    %vm43 = vcmask 523264
    %v45 = vsel %vm43, %v34, 0
    %47 = vmatprep.subr.mxu0 0.0
    %v48 = vand.u32 %v35, 4294901760
    %49 = vmatpush1.msra.mxu0 %v48
    %50 = vmatprep.subr.mxu0 0.0
    %v51 = vand.u32 %v36, 4294901760
    %52 = vmatpush1.msra.mxu0 %v51
    %53 = vmatprep.subr.mxu0 0.0
    %v54 = vand.u32 %v37, 4294901760
    %55 = vmatpush1.msra.mxu0 %v54
    %56 = vmatprep.subr.mxu0 0.0
    %v57 = vand.u32 %v38, 4294901760
    %58 = vmatpush1.msra.mxu0 %v57
    %59 = vmatprep.subr.mxu0 0.0
    %v60 = vand.u32 %v39, 4294901760
    %61 = vmatpush1.msra.mxu0 %v60
    %62 = vmatprep.subr.mxu0 0.0
    %v63 = vand.u32 %v40, 4294901760
    %64 = vmatpush1.msra.mxu0 %v63
    %65 = vmatprep.subr.mxu0 0.0
    %v66 = vand.u32 %v41, 4294901760
    %67 = vmatpush1.msra.mxu0 %v66
    %68 = vmatprep.subr.mxu0 0.0
    %v69 = vand.u32 %v42, 4294901760
    %70 = vmatpush1.msra.mxu0 %v69
    %71 = vmatprep.subr.mxu0 0.0
    %72 = vmatpush1.msra.mxu0 0.0
    %73 = vmatprep.subr.mxu0 0.0
    %74 = vmatpush1.msra.mxu0 0.0
    %75 = vmatprep.subr.mxu0 0.0
    %76 = vmatpush1.msra.mxu0 0.0
    %77 = vmatprep.subr.mxu0 0.0
    %78 = vmatpush1.msra.mxu0 0.0
    %79 = vmatprep.subr.mxu0 0.0
    %80 = vmatpush1.msra.mxu0 0.0
    %81 = vmatprep.subr.mxu0 0.0
    %82 = vmatpush1.msra.mxu0 0.0
    %83 = vmatprep.subr.mxu0 0.0
    %84 = vmatpush1.msra.mxu0 0.0
    %85 = vmatprep.subr.mxu0 0.0
    %86 = vmatpush1.msra.mxu0 0.0
    %87 = vmatprep.subr.mxu0 0.0
    %88 = vmatpush1.msra.mxu0 0.0
    %89 = vmatprep.subr.mxu0 0.0
    %90 = vmatpush1.msra.mxu0 0.0
    %91 = vmatprep.subr.mxu0 0.0
    %92 = vmatpush1.msra.mxu0 0.0
    %93 = vmatprep.subr.mxu0 0.0
    %94 = vmatpush1.msra.mxu0 0.0
    %95 = vmatprep.subr.mxu0 0.0
    %96 = vmatpush1.msra.mxu0 0.0
    %97 = vmatprep.subr.mxu0 0.0
    %98 = vmatpush1.msra.mxu0 0.0
    %99 = vmatprep.subr.mxu0 0.0
    %100 = vmatpush1.msra.mxu0 0.0
    %101 = vmatprep.subr.mxu0 0.0
    %102 = vmatpush1.msra.mxu0 0.0
    %103 = vmatprep.subr.mxu0 0.0
    %104 = vmatpush1.msra.mxu0 0.0
    %105 = vmatprep.subr.mxu0 0.0
    %106 = vmatpush1.msra.mxu0 0.0
    %107 = vmatprep.subr.mxu0 0.0
    %108 = vmatpush1.msra.mxu0 0.0
    %109 = vmatprep.subr.mxu0 0.0
    %110 = vmatpush1.msra.mxu0 0.0
    %111 = vmatprep.subr.mxu0 0.0
    %112 = vmatpush1.msra.mxu0 0.0
    %113 = vmatprep.subr.mxu0 0.0
    %114 = vmatpush1.msra.mxu0 0.0
    %115 = vmatprep.subr.mxu0 0.0
    %116 = vmatpush1.msra.mxu0 0.0
    %117 = vmatprep.subr.mxu0 0.0
    %118 = vmatpush1.msra.mxu0 0.0
    %119 = vmatprep.mubr.f32.mxu0 0.0
    %v120 = vand.u32 %v45, 4294901760
    %v121 = vsub.f32 %v45, %v120
    %v122 = vand.u32 %v121, 4294901760
    %v123 = vsub.f32 %v121, %v122
    %v124 = vand.u32 %v123, 4294901760
    %125 = vmatmul.mubr.f32.gmra.mrb[0].mxu0 %v124
    %v126 = vpop.f32.mrb[0].mxu0
    %v127 = vadd.f32 0.0, %v126
    %v128 = vpop.f32.mrb[0].mxu0
    %129 = vdwg.mxu0
    %130 = vmatprep.subr.mxu0 0.0
    %v131 = vand.u32 %v35, 4294901760
    %v132 = vsub.f32 %v35, %v131
    %v133 = vand.u32 %v132, 4294901760
    %v134 = vsub.f32 %v132, %v133
    %v135 = vand.u32 %v134, 4294901760
    %136 = vmatpush1.msra.mxu0 %v135
    %137 = vmatprep.subr.mxu0 0.0
    %v138 = vand.u32 %v36, 4294901760
    %v139 = vsub.f32 %v36, %v138
    %v140 = vand.u32 %v139, 4294901760
    %v141 = vsub.f32 %v139, %v140
    %v142 = vand.u32 %v141, 4294901760
    %143 = vmatpush1.msra.mxu0 %v142
    %144 = vmatprep.subr.mxu0 0.0
    %v145 = vand.u32 %v37, 4294901760
    %v146 = vsub.f32 %v37, %v145
    %v147 = vand.u32 %v146, 4294901760
    %v148 = vsub.f32 %v146, %v147
    %v149 = vand.u32 %v148, 4294901760
    %150 = vmatpush1.msra.mxu0 %v149
    %151 = vmatprep.subr.mxu0 0.0
    %v152 = vand.u32 %v38, 4294901760
    %v153 = vsub.f32 %v38, %v152
    %v154 = vand.u32 %v153, 4294901760
    %v155 = vsub.f32 %v153, %v154
    %v156 = vand.u32 %v155, 4294901760
    %157 = vmatpush1.msra.mxu0 %v156
    %158 = vmatprep.subr.mxu0 0.0
    %v159 = vand.u32 %v39, 4294901760
    %v160 = vsub.f32 %v39, %v159
    %v161 = vand.u32 %v160, 4294901760
    %v162 = vsub.f32 %v160, %v161
    %v163 = vand.u32 %v162, 4294901760
    %164 = vmatpush1.msra.mxu0 %v163
    %165 = vmatprep.subr.mxu0 0.0
    %v166 = vand.u32 %v40, 4294901760
    %v167 = vsub.f32 %v40, %v166
    %v168 = vand.u32 %v167, 4294901760
    %v169 = vsub.f32 %v167, %v168
    %v170 = vand.u32 %v169, 4294901760
    %171 = vmatpush1.msra.mxu0 %v170
    %172 = vmatprep.subr.mxu0 0.0
    %v173 = vand.u32 %v41, 4294901760
    %v174 = vsub.f32 %v41, %v173
    %v175 = vand.u32 %v174, 4294901760
    %v176 = vsub.f32 %v174, %v175
    %v177 = vand.u32 %v176, 4294901760
    %178 = vmatpush1.msra.mxu0 %v177
    %179 = vmatprep.subr.mxu0 0.0
    %v180 = vand.u32 %v42, 4294901760
    %v181 = vsub.f32 %v42, %v180
    %v182 = vand.u32 %v181, 4294901760
    %v183 = vsub.f32 %v181, %v182
    %v184 = vand.u32 %v183, 4294901760
    %185 = vmatpush1.msra.mxu0 %v184
    %186 = vmatprep.subr.mxu0 0.0
    %187 = vmatpush1.msra.mxu0 0.0
    %188 = vmatprep.subr.mxu0 0.0
    %189 = vmatpush1.msra.mxu0 0.0
    %190 = vmatprep.subr.mxu0 0.0
    %191 = vmatpush1.msra.mxu0 0.0
    %192 = vmatprep.subr.mxu0 0.0
    %193 = vmatpush1.msra.mxu0 0.0
    %194 = vmatprep.subr.mxu0 0.0
    %195 = vmatpush1.msra.mxu0 0.0
    %196 = vmatprep.subr.mxu0 0.0
    %197 = vmatpush1.msra.mxu0 0.0
    %198 = vmatprep.subr.mxu0 0.0
    %199 = vmatpush1.msra.mxu0 0.0
    %200 = vmatprep.subr.mxu0 0.0
    %201 = vmatpush1.msra.mxu0 0.0
    %202 = vmatprep.subr.mxu0 0.0
    %203 = vmatpush1.msra.mxu0 0.0
    %204 = vmatprep.subr.mxu0 0.0
    %205 = vmatpush1.msra.mxu0 0.0
    %206 = vmatprep.subr.mxu0 0.0
    %207 = vmatpush1.msra.mxu0 0.0
    %208 = vmatprep.subr.mxu0 0.0
    %209 = vmatpush1.msra.mxu0 0.0
    %210 = vmatprep.subr.mxu0 0.0
    %211 = vmatpush1.msra.mxu0 0.0
    %212 = vmatprep.subr.mxu0 0.0
    %213 = vmatpush1.msra.mxu0 0.0
    %214 = vmatprep.subr.mxu0 0.0
    %215 = vmatpush1.msra.mxu0 0.0
    %216 = vmatprep.subr.mxu0 0.0
    %217 = vmatpush1.msra.mxu0 0.0
    %218 = vmatprep.subr.mxu0 0.0
    %219 = vmatpush1.msra.mxu0 0.0
    %220 = vmatprep.subr.mxu0 0.0
    %221 = vmatpush1.msra.mxu0 0.0
    %222 = vmatprep.subr.mxu0 0.0
    %223 = vmatpush1.msra.mxu0 0.0
    %224 = vmatprep.subr.mxu0 0.0
    %225 = vmatpush1.msra.mxu0 0.0
    %226 = vmatprep.subr.mxu0 0.0
    %227 = vmatpush1.msra.mxu0 0.0
    %228 = vmatprep.subr.mxu0 0.0
    %229 = vmatpush1.msra.mxu0 0.0
    %230 = vmatprep.subr.mxu0 0.0
    %231 = vmatpush1.msra.mxu0 0.0
    %232 = vmatprep.subr.mxu0 0.0
    %233 = vmatpush1.msra.mxu0 0.0
    %234 = vmatprep.mubr.f32.mxu0 0.0
    %v235 = vand.u32 %v45, 4294901760
    %236 = vmatmul.mubr.f32.gmra.mrb[0].mxu0 %v235
    %v237 = vpop.f32.mrb[0].mxu0
    %v238 = vadd.f32 %v127, %v237
    %v239 = vpop.f32.mrb[0].mxu0
    %240 = vdwg.mxu0
    %241 = vmatprep.subr.mxu0 0.0
    %v242 = vand.u32 %v35, 4294901760
    %v243 = vsub.f32 %v35, %v242
    %244 = vmatpush1.msra.mxu0 %v243
    %245 = vmatprep.subr.mxu0 0.0
    %v246 = vand.u32 %v36, 4294901760
    %v247 = vsub.f32 %v36, %v246
    %248 = vmatpush1.msra.mxu0 %v247
    %249 = vmatprep.subr.mxu0 0.0
    %v250 = vand.u32 %v37, 4294901760
    %v251 = vsub.f32 %v37, %v250
    %252 = vmatpush1.msra.mxu0 %v251
    %253 = vmatprep.subr.mxu0 0.0
    %v254 = vand.u32 %v38, 4294901760
    %v255 = vsub.f32 %v38, %v254
    %256 = vmatpush1.msra.mxu0 %v255
    %257 = vmatprep.subr.mxu0 0.0
    %v258 = vand.u32 %v39, 4294901760
    %v259 = vsub.f32 %v39, %v258
    %260 = vmatpush1.msra.mxu0 %v259
    %261 = vmatprep.subr.mxu0 0.0
    %v262 = vand.u32 %v40, 4294901760
    %v263 = vsub.f32 %v40, %v262
    %264 = vmatpush1.msra.mxu0 %v263
    %265 = vmatprep.subr.mxu0 0.0
    %v266 = vand.u32 %v41, 4294901760
    %v267 = vsub.f32 %v41, %v266
    %268 = vmatpush1.msra.mxu0 %v267
    %269 = vmatprep.subr.mxu0 0.0
    %v270 = vand.u32 %v42, 4294901760
    %v271 = vsub.f32 %v42, %v270
    %272 = vmatpush1.msra.mxu0 %v271
    %273 = vmatprep.subr.mxu0 0.0
    %274 = vmatpush1.msra.mxu0 0.0
    %275 = vmatprep.subr.mxu0 0.0
    %276 = vmatpush1.msra.mxu0 0.0
    %277 = vmatprep.subr.mxu0 0.0
    %278 = vmatpush1.msra.mxu0 0.0
    %279 = vmatprep.subr.mxu0 0.0
    %280 = vmatpush1.msra.mxu0 0.0
    %281 = vmatprep.subr.mxu0 0.0
    %282 = vmatpush1.msra.mxu0 0.0
    %283 = vmatprep.subr.mxu0 0.0
    %284 = vmatpush1.msra.mxu0 0.0
    %285 = vmatprep.subr.mxu0 0.0
    %286 = vmatpush1.msra.mxu0 0.0
    %287 = vmatprep.subr.mxu0 0.0
    %288 = vmatpush1.msra.mxu0 0.0
    %289 = vmatprep.subr.mxu0 0.0
    %290 = vmatpush1.msra.mxu0 0.0
    %291 = vmatprep.subr.mxu0 0.0
    %292 = vmatpush1.msra.mxu0 0.0
    %293 = vmatprep.subr.mxu0 0.0
    %294 = vmatpush1.msra.mxu0 0.0
    %295 = vmatprep.subr.mxu0 0.0
    %296 = vmatpush1.msra.mxu0 0.0
    %297 = vmatprep.subr.mxu0 0.0
    %298 = vmatpush1.msra.mxu0 0.0
    %299 = vmatprep.subr.mxu0 0.0
    %300 = vmatpush1.msra.mxu0 0.0
    %301 = vmatprep.subr.mxu0 0.0
    %302 = vmatpush1.msra.mxu0 0.0
    %303 = vmatprep.subr.mxu0 0.0
    %304 = vmatpush1.msra.mxu0 0.0
    %305 = vmatprep.subr.mxu0 0.0
    %306 = vmatpush1.msra.mxu0 0.0
    %307 = vmatprep.subr.mxu0 0.0
    %308 = vmatpush1.msra.mxu0 0.0
    %309 = vmatprep.subr.mxu0 0.0
    %310 = vmatpush1.msra.mxu0 0.0
    %311 = vmatprep.subr.mxu0 0.0
    %312 = vmatpush1.msra.mxu0 0.0
    %313 = vmatprep.subr.mxu0 0.0
    %314 = vmatpush1.msra.mxu0 0.0
    %315 = vmatprep.subr.mxu0 0.0
    %316 = vmatpush1.msra.mxu0 0.0
    %317 = vmatprep.subr.mxu0 0.0
    %318 = vmatpush1.msra.mxu0 0.0
    %319 = vmatprep.subr.mxu0 0.0
    %320 = vmatpush1.msra.mxu0 0.0
    %321 = vmatprep.mubr.f32.mxu0 0.0
    %v322 = vand.u32 %v45, 4294901760
    %v323 = vsub.f32 %v45, %v322
    %324 = vmatmul.mubr.f32.gmra.mrb[0].mxu0 %v323
    %v325 = vpop.f32.mrb[0].mxu0
    %v326 = vadd.f32 %v238, %v325
    %v327 = vpop.f32.mrb[0].mxu0
    %328 = vdwg.mxu0
    %329 = vmatprep.subr.mxu0 0.0
    %v330 = vand.u32 %v35, 4294901760
    %331 = vmatpush1.msra.mxu0 %v330
    %332 = vmatprep.subr.mxu0 0.0
    %v333 = vand.u32 %v36, 4294901760
    %334 = vmatpush1.msra.mxu0 %v333
    %335 = vmatprep.subr.mxu0 0.0
    %v336 = vand.u32 %v37, 4294901760
    %337 = vmatpush1.msra.mxu0 %v336
    %338 = vmatprep.subr.mxu0 0.0
    %v339 = vand.u32 %v38, 4294901760
    %340 = vmatpush1.msra.mxu0 %v339
    %341 = vmatprep.subr.mxu0 0.0
    %v342 = vand.u32 %v39, 4294901760
    %343 = vmatpush1.msra.mxu0 %v342
    %344 = vmatprep.subr.mxu0 0.0
    %v345 = vand.u32 %v40, 4294901760
    %346 = vmatpush1.msra.mxu0 %v345
    %347 = vmatprep.subr.mxu0 0.0
    %v348 = vand.u32 %v41, 4294901760
    %349 = vmatpush1.msra.mxu0 %v348
    %350 = vmatprep.subr.mxu0 0.0
    %v351 = vand.u32 %v42, 4294901760
    %352 = vmatpush1.msra.mxu0 %v351
    %353 = vmatprep.subr.mxu0 0.0
    %354 = vmatpush1.msra.mxu0 0.0
    %355 = vmatprep.subr.mxu0 0.0
    %356 = vmatpush1.msra.mxu0 0.0
    %357 = vmatprep.subr.mxu0 0.0
    %358 = vmatpush1.msra.mxu0 0.0
    %359 = vmatprep.subr.mxu0 0.0
    %360 = vmatpush1.msra.mxu0 0.0
    %361 = vmatprep.subr.mxu0 0.0
    %362 = vmatpush1.msra.mxu0 0.0
    %363 = vmatprep.subr.mxu0 0.0
    %364 = vmatpush1.msra.mxu0 0.0
    %365 = vmatprep.subr.mxu0 0.0
    %366 = vmatpush1.msra.mxu0 0.0
    %367 = vmatprep.subr.mxu0 0.0
    %368 = vmatpush1.msra.mxu0 0.0
    %369 = vmatprep.subr.mxu0 0.0
    %370 = vmatpush1.msra.mxu0 0.0
    %371 = vmatprep.subr.mxu0 0.0
    %372 = vmatpush1.msra.mxu0 0.0
    %373 = vmatprep.subr.mxu0 0.0
    %374 = vmatpush1.msra.mxu0 0.0
    %375 = vmatprep.subr.mxu0 0.0
    %376 = vmatpush1.msra.mxu0 0.0
    %377 = vmatprep.subr.mxu0 0.0
    %378 = vmatpush1.msra.mxu0 0.0
    %379 = vmatprep.subr.mxu0 0.0
    %380 = vmatpush1.msra.mxu0 0.0
    %381 = vmatprep.subr.mxu0 0.0
    %382 = vmatpush1.msra.mxu0 0.0
    %383 = vmatprep.subr.mxu0 0.0
    %384 = vmatpush1.msra.mxu0 0.0
    %385 = vmatprep.subr.mxu0 0.0
    %386 = vmatpush1.msra.mxu0 0.0
    %387 = vmatprep.subr.mxu0 0.0
    %388 = vmatpush1.msra.mxu0 0.0
    %389 = vmatprep.subr.mxu0 0.0
    %390 = vmatpush1.msra.mxu0 0.0
    %391 = vmatprep.subr.mxu0 0.0
    %392 = vmatpush1.msra.mxu0 0.0
    %393 = vmatprep.subr.mxu0 0.0
    %394 = vmatpush1.msra.mxu0 0.0
    %395 = vmatprep.subr.mxu0 0.0
    %396 = vmatpush1.msra.mxu0 0.0
    %397 = vmatprep.subr.mxu0 0.0
    %398 = vmatpush1.msra.mxu0 0.0
    %399 = vmatprep.subr.mxu0 0.0
    %400 = vmatpush1.msra.mxu0 0.0
    %401 = vmatprep.mubr.f32.mxu0 0.0
    %v402 = vand.u32 %v45, 4294901760
    %v403 = vsub.f32 %v45, %v402
    %v404 = vand.u32 %v403, 4294901760
    %405 = vmatmul.mubr.f32.gmra.mrb[0].mxu0 %v404
    %v406 = vpop.f32.mrb[0].mxu0
    %v407 = vadd.f32 %v326, %v406
    %v408 = vpop.f32.mrb[0].mxu0
    %409 = vdwg.mxu0
    %410 = vmatprep.subr.mxu0 0.0
    %v411 = vand.u32 %v35, 4294901760
    %v412 = vsub.f32 %v35, %v411
    %v413 = vand.u32 %v412, 4294901760
    %414 = vmatpush1.msra.mxu0 %v413
    %415 = vmatprep.subr.mxu0 0.0
    %v416 = vand.u32 %v36, 4294901760
    %v417 = vsub.f32 %v36, %v416
    %v418 = vand.u32 %v417, 4294901760
    %419 = vmatpush1.msra.mxu0 %v418
    %420 = vmatprep.subr.mxu0 0.0
    %v421 = vand.u32 %v37, 4294901760
    %v422 = vsub.f32 %v37, %v421
    %v423 = vand.u32 %v422, 4294901760
    %424 = vmatpush1.msra.mxu0 %v423
    %425 = vmatprep.subr.mxu0 0.0
    %v426 = vand.u32 %v38, 4294901760
    %v427 = vsub.f32 %v38, %v426
    %v428 = vand.u32 %v427, 4294901760
    %429 = vmatpush1.msra.mxu0 %v428
    %430 = vmatprep.subr.mxu0 0.0
    %v431 = vand.u32 %v39, 4294901760
    %v432 = vsub.f32 %v39, %v431
    %v433 = vand.u32 %v432, 4294901760
    %434 = vmatpush1.msra.mxu0 %v433
    %435 = vmatprep.subr.mxu0 0.0
    %v436 = vand.u32 %v40, 4294901760
    %v437 = vsub.f32 %v40, %v436
    %v438 = vand.u32 %v437, 4294901760
    %439 = vmatpush1.msra.mxu0 %v438
    %440 = vmatprep.subr.mxu0 0.0
    %v441 = vand.u32 %v41, 4294901760
    %v442 = vsub.f32 %v41, %v441
    %v443 = vand.u32 %v442, 4294901760
    %444 = vmatpush1.msra.mxu0 %v443
    %445 = vmatprep.subr.mxu0 0.0
    %v446 = vand.u32 %v42, 4294901760
    %v447 = vsub.f32 %v42, %v446
    %v448 = vand.u32 %v447, 4294901760
    %449 = vmatpush1.msra.mxu0 %v448
    %450 = vmatprep.subr.mxu0 0.0
    %451 = vmatpush1.msra.mxu0 0.0
    %452 = vmatprep.subr.mxu0 0.0
    %453 = vmatpush1.msra.mxu0 0.0
    %454 = vmatprep.subr.mxu0 0.0
    %455 = vmatpush1.msra.mxu0 0.0
    %456 = vmatprep.subr.mxu0 0.0
    %457 = vmatpush1.msra.mxu0 0.0
    %458 = vmatprep.subr.mxu0 0.0
    %459 = vmatpush1.msra.mxu0 0.0
    %460 = vmatprep.subr.mxu0 0.0
    %461 = vmatpush1.msra.mxu0 0.0
    %462 = vmatprep.subr.mxu0 0.0
    %463 = vmatpush1.msra.mxu0 0.0
    %464 = vmatprep.subr.mxu0 0.0
    %465 = vmatpush1.msra.mxu0 0.0
    %466 = vmatprep.subr.mxu0 0.0
    %467 = vmatpush1.msra.mxu0 0.0
    %468 = vmatprep.subr.mxu0 0.0
    %469 = vmatpush1.msra.mxu0 0.0
    %470 = vmatprep.subr.mxu0 0.0
    %471 = vmatpush1.msra.mxu0 0.0
    %472 = vmatprep.subr.mxu0 0.0
    %473 = vmatpush1.msra.mxu0 0.0
    %474 = vmatprep.subr.mxu0 0.0
    %475 = vmatpush1.msra.mxu0 0.0
    %476 = vmatprep.subr.mxu0 0.0
    %477 = vmatpush1.msra.mxu0 0.0
    %478 = vmatprep.subr.mxu0 0.0
    %479 = vmatpush1.msra.mxu0 0.0
    %480 = vmatprep.subr.mxu0 0.0
    %481 = vmatpush1.msra.mxu0 0.0
    %482 = vmatprep.subr.mxu0 0.0
    %483 = vmatpush1.msra.mxu0 0.0
    %484 = vmatprep.subr.mxu0 0.0
    %485 = vmatpush1.msra.mxu0 0.0
    %486 = vmatprep.subr.mxu0 0.0
    %487 = vmatpush1.msra.mxu0 0.0
    %488 = vmatprep.subr.mxu0 0.0
    %489 = vmatpush1.msra.mxu0 0.0
    %490 = vmatprep.subr.mxu0 0.0
    %491 = vmatpush1.msra.mxu0 0.0
    %492 = vmatprep.subr.mxu0 0.0
    %493 = vmatpush1.msra.mxu0 0.0
    %494 = vmatprep.subr.mxu0 0.0
    %495 = vmatpush1.msra.mxu0 0.0
    %496 = vmatprep.subr.mxu0 0.0
    %497 = vmatpush1.msra.mxu0 0.0
    %498 = vmatprep.mubr.f32.mxu0 0.0
    %v499 = vand.u32 %v45, 4294901760
    %500 = vmatmul.mubr.f32.gmra.mrb[0].mxu0 %v499
    %v501 = vpop.f32.mrb[0].mxu0
    %v502 = vadd.f32 %v407, %v501
    %v503 = vpop.f32.mrb[0].mxu0
    %504 = vdwg.mxu0
    %505 = vmatprep.subr.mxu0 0.0
    %v506 = vand.u32 %v35, 4294901760
    %507 = vmatpush1.msra.mxu0 %v506
    %508 = vmatprep.subr.mxu0 0.0
    %v509 = vand.u32 %v36, 4294901760
    %510 = vmatpush1.msra.mxu0 %v509
    %511 = vmatprep.subr.mxu0 0.0
    %v512 = vand.u32 %v37, 4294901760
    %513 = vmatpush1.msra.mxu0 %v512
    %514 = vmatprep.subr.mxu0 0.0
    %v515 = vand.u32 %v38, 4294901760
    %516 = vmatpush1.msra.mxu0 %v515
    %517 = vmatprep.subr.mxu0 0.0
    %v518 = vand.u32 %v39, 4294901760
    %519 = vmatpush1.msra.mxu0 %v518
    %520 = vmatprep.subr.mxu0 0.0
    %v521 = vand.u32 %v40, 4294901760
    %522 = vmatpush1.msra.mxu0 %v521
    %523 = vmatprep.subr.mxu0 0.0
    %v524 = vand.u32 %v41, 4294901760
    %525 = vmatpush1.msra.mxu0 %v524
    %526 = vmatprep.subr.mxu0 0.0
    %v527 = vand.u32 %v42, 4294901760
    %528 = vmatpush1.msra.mxu0 %v527
    %529 = vmatprep.subr.mxu0 0.0
    %530 = vmatpush1.msra.mxu0 0.0
    %531 = vmatprep.subr.mxu0 0.0
    %532 = vmatpush1.msra.mxu0 0.0
    %533 = vmatprep.subr.mxu0 0.0
    %534 = vmatpush1.msra.mxu0 0.0
    %535 = vmatprep.subr.mxu0 0.0
    %536 = vmatpush1.msra.mxu0 0.0
    %537 = vmatprep.subr.mxu0 0.0
    %538 = vmatpush1.msra.mxu0 0.0
    %539 = vmatprep.subr.mxu0 0.0
    %540 = vmatpush1.msra.mxu0 0.0
    %541 = vmatprep.subr.mxu0 0.0
    %542 = vmatpush1.msra.mxu0 0.0
    %543 = vmatprep.subr.mxu0 0.0
    %544 = vmatpush1.msra.mxu0 0.0
    %545 = vmatprep.subr.mxu0 0.0
    %546 = vmatpush1.msra.mxu0 0.0
    %547 = vmatprep.subr.mxu0 0.0
    %548 = vmatpush1.msra.mxu0 0.0
    %549 = vmatprep.subr.mxu0 0.0
    %550 = vmatpush1.msra.mxu0 0.0
    %551 = vmatprep.subr.mxu0 0.0
    %552 = vmatpush1.msra.mxu0 0.0
    %553 = vmatprep.subr.mxu0 0.0
    %554 = vmatpush1.msra.mxu0 0.0
    %555 = vmatprep.subr.mxu0 0.0
    %556 = vmatpush1.msra.mxu0 0.0
    %557 = vmatprep.subr.mxu0 0.0
    %558 = vmatpush1.msra.mxu0 0.0
    %559 = vmatprep.subr.mxu0 0.0
    %560 = vmatpush1.msra.mxu0 0.0
    %561 = vmatprep.subr.mxu0 0.0
    %562 = vmatpush1.msra.mxu0 0.0
    %563 = vmatprep.subr.mxu0 0.0
    %564 = vmatpush1.msra.mxu0 0.0
    %565 = vmatprep.subr.mxu0 0.0
    %566 = vmatpush1.msra.mxu0 0.0
    %567 = vmatprep.subr.mxu0 0.0
    %568 = vmatpush1.msra.mxu0 0.0
    %569 = vmatprep.subr.mxu0 0.0
    %570 = vmatpush1.msra.mxu0 0.0
    %571 = vmatprep.subr.mxu0 0.0
    %572 = vmatpush1.msra.mxu0 0.0
    %573 = vmatprep.subr.mxu0 0.0
    %574 = vmatpush1.msra.mxu0 0.0
    %575 = vmatprep.subr.mxu0 0.0
    %576 = vmatpush1.msra.mxu0 0.0
    %577 = vmatprep.mubr.f32.mxu0 0.0
    %v578 = vand.u32 %v45, 4294901760
    %579 = vmatmul.mubr.f32.gmra.mrb[0].mxu0 %v578
    %v580 = vpop.f32.mrb[0].mxu0
    %v581 = vadd.f32 %v502, %v580
    %v582 = vpop.f32.mrb[0].mxu0
    %583 = vdwg.mxu0
    %584 = vst [vmem:[#allocation5] sm:$0xff] %v581
    // Predicated region
    $region14: #{tpu_custom_call.1} parent=1 // pred_check
      _
    $region15: #{tpu_custom_call.1} parent=1 // pred_check_branch
      %586 = sbr.rel (0) target = $region17
    $region16: #{tpu_custom_call.1} parent=1 // pred_region
      %s588 = ssub.s32 128, 128
      %589 = vsyncadd [#allocation4], %s588
      %s591 = sshll.u32 [#allocation5], 4
      %s592 = int_to_ptr.vmem [resolvable:$true] %s591
      %594 = dma.vmem_to_hbm [thread:$0]  %s592, 128, %s2, [#allocation4]
    $region17: #{tpu_custom_call.1} parent=1 // pred_fallthru
      _
    // Predicated region
    $region18: #{tpu_custom_call.1} parent=1 // pred_check
      _
    $region19: #{tpu_custom_call.1} parent=1 // pred_check_branch
      %596 = sbr.rel (0) target = $region21
    $region20: #{tpu_custom_call.1} parent=1 // pred_region
      %597 = dma.done [#allocation4], 128
    $region21: #{tpu_custom_call.1} parent=1 // pred_fallthru
      _
    %598 = vsyncpa [#allocation3], 1
    %599 = vsyncpa [#allocation4], 1

// kernel: tpu_custom_call.1
$region0: #{tpu_custom_call.1}
  #allocation0 [shape = 'u32[]', space=smem, size = 0x4, offset = 0x4, fixed_abs, tag = 'smem constant byte address 0x4 - core index']
  #allocation1 [shape = 'u32[144,128]{1,0:T(1,128)}', space=vmem, size = 0x12000, scoped, tag = 'internal scratch']
  %s0 = inlined_call_operand.vmem [shape: s32[8,1], index: 0, kind: input, shape index: {}]
  %s1 = inlined_call_operand.hbm [shape: f32[64,128], index: 1, kind: input, shape index: {}]
  %s2 = inlined_call_operand.hbm [shape: f32[8,128], index: 2, kind: output, shape index: {}]
  %s3 = sld [smem:[#allocation0]]
  $region22: #{tpu_custom_call.1} parent=0
    _
  %s5 = ssub.s32 1, %s3
  %s6 = scalar_select 0, %s5, %s3
  $region1: #{tpu_custom_call.1} parent=0
    #allocation2 [shape = 'u8[32768]{0}', space=vmem, size = 0x8000, scoped, tag = 'input window, operand 1, single buffered']
    #allocation3 [shape = 's32[1]{0}', space=sflag, size = 0x4, scoped, tag = 'scoped memory for tpu_custom_call.1']
    #allocation4 [shape = 's32[1]{0}', space=sflag, size = 0x4, scoped, tag = 'scoped memory for tpu_custom_call.1']
    #allocation5 [shape = 'u8[4096]{0}', space=vmem, size = 0x1000, scoped, tag = 'output window, operand 0, single buffered']
    %7 = vsyncpa [#allocation3], 0
    %8 = vsyncpa [#allocation4], 0
    // Predicated region
    $region2: #{tpu_custom_call.1} parent=1 // pred_check
      _
    $region3: #{tpu_custom_call.1} parent=1 // pred_check_branch
      %10 = sbr.rel (0) target = $region5
    $region4: #{tpu_custom_call.1} parent=1 // pred_region
      _
    $region5: #{tpu_custom_call.1} parent=1 // pred_fallthru
      _
    // Predicated region
    $region6: #{tpu_custom_call.1} parent=1 // pred_check
      _
    $region7: #{tpu_custom_call.1} parent=1 // pred_check_branch
      %12 = sbr.rel (0) target = $region9
    $region8: #{tpu_custom_call.1} parent=1 // pred_region
      %s14 = ssub.s32 1024, 1024
      %15 = vsyncadd [#allocation3], %s14
      %s16 = sshll.u32 [#allocation2], 4
      %s17 = int_to_ptr.vmem [resolvable:$true] %s16
      %22 = dma.hbm_to_vmem [thread:$0]  %s1, 1024, %s17, [#allocation3], 128, 128, 8
    $region9: #{tpu_custom_call.1} parent=1 // pred_fallthru
      _
    // Predicated region
    $region10: #{tpu_custom_call.1} parent=1 // pred_check
      _
    $region11: #{tpu_custom_call.1} parent=1 // pred_check_branch
      %24 = sbr.rel (0) target = $region13
    $region12: #{tpu_custom_call.1} parent=1 // pred_region
      %25 = dma.done [#allocation3], 1024
    $region13: #{tpu_custom_call.1} parent=1 // pred_fallthru
      _
    %v26 = vld [vmem:[%s0] sm:$0xff]
    %v27 = vlaneseq
    %v28 = vand.u32 %v27, 127
    %29 = vset.pattern.permute.xlu0 0
    %30 = vperm.xlu0 %29, %v26
    %v31 = vpop.permute.xlu0 %30
    %vm32 = vcmp.eq.s32.totalorder %v31, %v28
    %v33 = vsel %vm32, 1, 0
    %v34 = vcvt.s32.f32 %v33
    %v35 = vld [vmem:[#allocation2] sm:$0xff]
    %v36 = vld [vmem:[#allocation2 + $0x8] sm:$0xff]
    %v37 = vld [vmem:[#allocation2 + $0x10] sm:$0xff]
    %v38 = vld [vmem:[#allocation2 + $0x18] sm:$0xff]
    %v39 = vld [vmem:[#allocation2 + $0x20] sm:$0xff]
    %v40 = vld [vmem:[#allocation2 + $0x28] sm:$0xff]
    %v41 = vld [vmem:[#allocation2 + $0x30] sm:$0xff]
    %v42 = vld [vmem:[#allocation2 + $0x38] sm:$0xff]
    %vm43 = vcmask 523264
    %v45 = vsel %vm43, %v34, 0
    %47 = vmatprep.subr.mxu0 0.0
    %v48 = vand.u32 %v35, 4294901760
    %49 = vmatpush1.msra.mxu0 %v48
    %50 = vmatprep.subr.mxu0 0.0
    %v51 = vand.u32 %v36, 4294901760
    %52 = vmatpush1.msra.mxu0 %v51
    %53 = vmatprep.subr.mxu0 0.0
    %v54 = vand.u32 %v37, 4294901760
    %55 = vmatpush1.msra.mxu0 %v54
    %56 = vmatprep.subr.mxu0 0.0
    %v57 = vand.u32 %v38, 4294901760
    %58 = vmatpush1.msra.mxu0 %v57
    %59 = vmatprep.subr.mxu0 0.0
    %v60 = vand.u32 %v39, 4294901760
    %61 = vmatpush1.msra.mxu0 %v60
    %62 = vmatprep.subr.mxu0 0.0
    %v63 = vand.u32 %v40, 4294901760
    %64 = vmatpush1.msra.mxu0 %v63
    %65 = vmatprep.subr.mxu0 0.0
    %v66 = vand.u32 %v41, 4294901760
    %67 = vmatpush1.msra.mxu0 %v66
    %68 = vmatprep.subr.mxu0 0.0
    %v69 = vand.u32 %v42, 4294901760
    %70 = vmatpush1.msra.mxu0 %v69
    %71 = vmatprep.subr.mxu0 0.0
    %72 = vmatpush1.msra.mxu0 0.0
    %73 = vmatprep.subr.mxu0 0.0
    %74 = vmatpush1.msra.mxu0 0.0
    %75 = vmatprep.subr.mxu0 0.0
    %76 = vmatpush1.msra.mxu0 0.0
    %77 = vmatprep.subr.mxu0 0.0
    %78 = vmatpush1.msra.mxu0 0.0
    %79 = vmatprep.subr.mxu0 0.0
    %80 = vmatpush1.msra.mxu0 0.0
    %81 = vmatprep.subr.mxu0 0.0
    %82 = vmatpush1.msra.mxu0 0.0
    %83 = vmatprep.subr.mxu0 0.0
    %84 = vmatpush1.msra.mxu0 0.0
    %85 = vmatprep.subr.mxu0 0.0
    %86 = vmatpush1.msra.mxu0 0.0
    %87 = vmatprep.subr.mxu0 0.0
    %88 = vmatpush1.msra.mxu0 0.0
    %89 = vmatprep.subr.mxu0 0.0
    %90 = vmatpush1.msra.mxu0 0.0
    %91 = vmatprep.subr.mxu0 0.0
    %92 = vmatpush1.msra.mxu0 0.0
    %93 = vmatprep.subr.mxu0 0.0
    %94 = vmatpush1.msra.mxu0 0.0
    %95 = vmatprep.subr.mxu0 0.0
    %96 = vmatpush1.msra.mxu0 0.0
    %97 = vmatprep.subr.mxu0 0.0
    %98 = vmatpush1.msra.mxu0 0.0
    %99 = vmatprep.subr.mxu0 0.0
    %100 = vmatpush1.msra.mxu0 0.0
    %101 = vmatprep.subr.mxu0 0.0
    %102 = vmatpush1.msra.mxu0 0.0
    %103 = vmatprep.subr.mxu0 0.0
    %104 = vmatpush1.msra.mxu0 0.0
    %105 = vmatprep.subr.mxu0 0.0
    %106 = vmatpush1.msra.mxu0 0.0
    %107 = vmatprep.subr.mxu0 0.0
    %108 = vmatpush1.msra.mxu0 0.0
    %109 = vmatprep.subr.mxu0 0.0
    %110 = vmatpush1.msra.mxu0 0.0
    %111 = vmatprep.subr.mxu0 0.0
    %112 = vmatpush1.msra.mxu0 0.0
    %113 = vmatprep.subr.mxu0 0.0
    %114 = vmatpush1.msra.mxu0 0.0
    %115 = vmatprep.subr.mxu0 0.0
    %116 = vmatpush1.msra.mxu0 0.0
    %117 = vmatprep.subr.mxu0 0.0
    %118 = vmatpush1.msra.mxu0 0.0
    %119 = vmatprep.mubr.f32.mxu0 0.0
    %v120 = vand.u32 %v45, 4294901760
    %v121 = vsub.f32 %v45, %v120
    %v122 = vand.u32 %v121, 4294901760
    %v123 = vsub.f32 %v121, %v122
    %v124 = vand.u32 %v123, 4294901760
    %125 = vmatmul.mubr.f32.gmra.mrb[0].mxu0 %v124
    %v126 = vpop.f32.mrb[0].mxu0
    %v127 = vadd.f32 0.0, %v126
    %v128 = vpop.f32.mrb[0].mxu0
    %129 = vdwg.mxu0
    %130 = vmatprep.subr.mxu0 0.0
    %v131 = vand.u32 %v35, 4294901760
    %v132 = vsub.f32 %v35, %v131
    %v133 = vand.u32 %v132, 4294901760
    %v134 = vsub.f32 %v132, %v133
    %v135 = vand.u32 %v134, 4294901760
    %136 = vmatpush1.msra.mxu0 %v135
    %137 = vmatprep.subr.mxu0 0.0
    %v138 = vand.u32 %v36, 4294901760
    %v139 = vsub.f32 %v36, %v138
    %v140 = vand.u32 %v139, 4294901760
    %v141 = vsub.f32 %v139, %v140
    %v142 = vand.u32 %v141, 4294901760
    %143 = vmatpush1.msra.mxu0 %v142
    %144 = vmatprep.subr.mxu0 0.0
    %v145 = vand.u32 %v37, 4294901760
    %v146 = vsub.f32 %v37, %v145
    %v147 = vand.u32 %v146, 4294901760
    %v148 = vsub.f32 %v146, %v147
    %v149 = vand.u32 %v148, 4294901760
    %150 = vmatpush1.msra.mxu0 %v149
    %151 = vmatprep.subr.mxu0 0.0
    %v152 = vand.u32 %v38, 4294901760
    %v153 = vsub.f32 %v38, %v152
    %v154 = vand.u32 %v153, 4294901760
    %v155 = vsub.f32 %v153, %v154
    %v156 = vand.u32 %v155, 4294901760
    %157 = vmatpush1.msra.mxu0 %v156
    %158 = vmatprep.subr.mxu0 0.0
    %v159 = vand.u32 %v39, 4294901760
    %v160 = vsub.f32 %v39, %v159
    %v161 = vand.u32 %v160, 4294901760
    %v162 = vsub.f32 %v160, %v161
    %v163 = vand.u32 %v162, 4294901760
    %164 = vmatpush1.msra.mxu0 %v163
    %165 = vmatprep.subr.mxu0 0.0
    %v166 = vand.u32 %v40, 4294901760
    %v167 = vsub.f32 %v40, %v166
    %v168 = vand.u32 %v167, 4294901760
    %v169 = vsub.f32 %v167, %v168
    %v170 = vand.u32 %v169, 4294901760
    %171 = vmatpush1.msra.mxu0 %v170
    %172 = vmatprep.subr.mxu0 0.0
    %v173 = vand.u32 %v41, 4294901760
    %v174 = vsub.f32 %v41, %v173
    %v175 = vand.u32 %v174, 4294901760
    %v176 = vsub.f32 %v174, %v175
    %v177 = vand.u32 %v176, 4294901760
    %178 = vmatpush1.msra.mxu0 %v177
    %179 = vmatprep.subr.mxu0 0.0
    %v180 = vand.u32 %v42, 4294901760
    %v181 = vsub.f32 %v42, %v180
    %v182 = vand.u32 %v181, 4294901760
    %v183 = vsub.f32 %v181, %v182
    %v184 = vand.u32 %v183, 4294901760
    %185 = vmatpush1.msra.mxu0 %v184
    %186 = vmatprep.subr.mxu0 0.0
    %187 = vmatpush1.msra.mxu0 0.0
    %188 = vmatprep.subr.mxu0 0.0
    %189 = vmatpush1.msra.mxu0 0.0
    %190 = vmatprep.subr.mxu0 0.0
    %191 = vmatpush1.msra.mxu0 0.0
    %192 = vmatprep.subr.mxu0 0.0
    %193 = vmatpush1.msra.mxu0 0.0
    %194 = vmatprep.subr.mxu0 0.0
    %195 = vmatpush1.msra.mxu0 0.0
    %196 = vmatprep.subr.mxu0 0.0
    %197 = vmatpush1.msra.mxu0 0.0
    %198 = vmatprep.subr.mxu0 0.0
    %199 = vmatpush1.msra.mxu0 0.0
    %200 = vmatprep.subr.mxu0 0.0
    %201 = vmatpush1.msra.mxu0 0.0
    %202 = vmatprep.subr.mxu0 0.0
    %203 = vmatpush1.msra.mxu0 0.0
    %204 = vmatprep.subr.mxu0 0.0
    %205 = vmatpush1.msra.mxu0 0.0
    %206 = vmatprep.subr.mxu0 0.0
    %207 = vmatpush1.msra.mxu0 0.0
    %208 = vmatprep.subr.mxu0 0.0
    %209 = vmatpush1.msra.mxu0 0.0
    %210 = vmatprep.subr.mxu0 0.0
    %211 = vmatpush1.msra.mxu0 0.0
    %212 = vmatprep.subr.mxu0 0.0
    %213 = vmatpush1.msra.mxu0 0.0
    %214 = vmatprep.subr.mxu0 0.0
    %215 = vmatpush1.msra.mxu0 0.0
    %216 = vmatprep.subr.mxu0 0.0
    %217 = vmatpush1.msra.mxu0 0.0
    %218 = vmatprep.subr.mxu0 0.0
    %219 = vmatpush1.msra.mxu0 0.0
    %220 = vmatprep.subr.mxu0 0.0
    %221 = vmatpush1.msra.mxu0 0.0
    %222 = vmatprep.subr.mxu0 0.0
    %223 = vmatpush1.msra.mxu0 0.0
    %224 = vmatprep.subr.mxu0 0.0
    %225 = vmatpush1.msra.mxu0 0.0
    %226 = vmatprep.subr.mxu0 0.0
    %227 = vmatpush1.msra.mxu0 0.0
    %228 = vmatprep.subr.mxu0 0.0
    %229 = vmatpush1.msra.mxu0 0.0
    %230 = vmatprep.subr.mxu0 0.0
    %231 = vmatpush1.msra.mxu0 0.0
    %232 = vmatprep.subr.mxu0 0.0
    %233 = vmatpush1.msra.mxu0 0.0
    %234 = vmatprep.mubr.f32.mxu0 0.0
    %v235 = vand.u32 %v45, 4294901760
    %236 = vmatmul.mubr.f32.gmra.mrb[0].mxu0 %v235
    %v237 = vpop.f32.mrb[0].mxu0
    %v238 = vadd.f32 %v127, %v237
    %v239 = vpop.f32.mrb[0].mxu0
    %240 = vdwg.mxu0
    %241 = vmatprep.subr.mxu0 0.0
    %v242 = vand.u32 %v35, 4294901760
    %v243 = vsub.f32 %v35, %v242
    %244 = vmatpush1.msra.mxu0 %v243
    %245 = vmatprep.subr.mxu0 0.0
    %v246 = vand.u32 %v36, 4294901760
    %v247 = vsub.f32 %v36, %v246
    %248 = vmatpush1.msra.mxu0 %v247
    %249 = vmatprep.subr.mxu0 0.0
    %v250 = vand.u32 %v37, 4294901760
    %v251 = vsub.f32 %v37, %v250
    %252 = vmatpush1.msra.mxu0 %v251
    %253 = vmatprep.subr.mxu0 0.0
    %v254 = vand.u32 %v38, 4294901760
    %v255 = vsub.f32 %v38, %v254
    %256 = vmatpush1.msra.mxu0 %v255
    %257 = vmatprep.subr.mxu0 0.0
    %v258 = vand.u32 %v39, 4294901760
    %v259 = vsub.f32 %v39, %v258
    %260 = vmatpush1.msra.mxu0 %v259
    %261 = vmatprep.subr.mxu0 0.0
    %v262 = vand.u32 %v40, 4294901760
    %v263 = vsub.f32 %v40, %v262
    %264 = vmatpush1.msra.mxu0 %v263
    %265 = vmatprep.subr.mxu0 0.0
    %v266 = vand.u32 %v41, 4294901760
    %v267 = vsub.f32 %v41, %v266
    %268 = vmatpush1.msra.mxu0 %v267
    %269 = vmatprep.subr.mxu0 0.0
    %v270 = vand.u32 %v42, 4294901760
    %v271 = vsub.f32 %v42, %v270
    %272 = vmatpush1.msra.mxu0 %v271
    %273 = vmatprep.subr.mxu0 0.0
    %274 = vmatpush1.msra.mxu0 0.0
    %275 = vmatprep.subr.mxu0 0.0
    %276 = vmatpush1.msra.mxu0 0.0
    %277 = vmatprep.subr.mxu0 0.0
    %278 = vmatpush1.msra.mxu0 0.0
    %279 = vmatprep.subr.mxu0 0.0
    %280 = vmatpush1.msra.mxu0 0.0
    %281 = vmatprep.subr.mxu0 0.0
    %282 = vmatpush1.msra.mxu0 0.0
    %283 = vmatprep.subr.mxu0 0.0
    %284 = vmatpush1.msra.mxu0 0.0
    %285 = vmatprep.subr.mxu0 0.0
    %286 = vmatpush1.msra.mxu0 0.0
    %287 = vmatprep.subr.mxu0 0.0
    %288 = vmatpush1.msra.mxu0 0.0
    %289 = vmatprep.subr.mxu0 0.0
    %290 = vmatpush1.msra.mxu0 0.0
    %291 = vmatprep.subr.mxu0 0.0
    %292 = vmatpush1.msra.mxu0 0.0
    %293 = vmatprep.subr.mxu0 0.0
    %294 = vmatpush1.msra.mxu0 0.0
    %295 = vmatprep.subr.mxu0 0.0
    %296 = vmatpush1.msra.mxu0 0.0
    %297 = vmatprep.subr.mxu0 0.0
    %298 = vmatpush1.msra.mxu0 0.0
    %299 = vmatprep.subr.mxu0 0.0
    %300 = vmatpush1.msra.mxu0 0.0
    %301 = vmatprep.subr.mxu0 0.0
    %302 = vmatpush1.msra.mxu0 0.0
    %303 = vmatprep.subr.mxu0 0.0
    %304 = vmatpush1.msra.mxu0 0.0
    %305 = vmatprep.subr.mxu0 0.0
    %306 = vmatpush1.msra.mxu0 0.0
    %307 = vmatprep.subr.mxu0 0.0
    %308 = vmatpush1.msra.mxu0 0.0
    %309 = vmatprep.subr.mxu0 0.0
    %310 = vmatpush1.msra.mxu0 0.0
    %311 = vmatprep.subr.mxu0 0.0
    %312 = vmatpush1.msra.mxu0 0.0
    %313 = vmatprep.subr.mxu0 0.0
    %314 = vmatpush1.msra.mxu0 0.0
    %315 = vmatprep.subr.mxu0 0.0
    %316 = vmatpush1.msra.mxu0 0.0
    %317 = vmatprep.subr.mxu0 0.0
    %318 = vmatpush1.msra.mxu0 0.0
    %319 = vmatprep.subr.mxu0 0.0
    %320 = vmatpush1.msra.mxu0 0.0
    %321 = vmatprep.mubr.f32.mxu0 0.0
    %v322 = vand.u32 %v45, 4294901760
    %v323 = vsub.f32 %v45, %v322
    %324 = vmatmul.mubr.f32.gmra.mrb[0].mxu0 %v323
    %v325 = vpop.f32.mrb[0].mxu0
    %v326 = vadd.f32 %v238, %v325
    %v327 = vpop.f32.mrb[0].mxu0
    %328 = vdwg.mxu0
    %329 = vmatprep.subr.mxu0 0.0
    %v330 = vand.u32 %v35, 4294901760
    %331 = vmatpush1.msra.mxu0 %v330
    %332 = vmatprep.subr.mxu0 0.0
    %v333 = vand.u32 %v36, 4294901760
    %334 = vmatpush1.msra.mxu0 %v333
    %335 = vmatprep.subr.mxu0 0.0
    %v336 = vand.u32 %v37, 4294901760
    %337 = vmatpush1.msra.mxu0 %v336
    %338 = vmatprep.subr.mxu0 0.0
    %v339 = vand.u32 %v38, 4294901760
    %340 = vmatpush1.msra.mxu0 %v339
    %341 = vmatprep.subr.mxu0 0.0
    %v342 = vand.u32 %v39, 4294901760
    %343 = vmatpush1.msra.mxu0 %v342
    %344 = vmatprep.subr.mxu0 0.0
    %v345 = vand.u32 %v40, 4294901760
    %346 = vmatpush1.msra.mxu0 %v345
    %347 = vmatprep.subr.mxu0 0.0
    %v348 = vand.u32 %v41, 4294901760
    %349 = vmatpush1.msra.mxu0 %v348
    %350 = vmatprep.subr.mxu0 0.0
    %v351 = vand.u32 %v42, 4294901760
    %352 = vmatpush1.msra.mxu0 %v351
    %353 = vmatprep.subr.mxu0 0.0
    %354 = vmatpush1.msra.mxu0 0.0
    %355 = vmatprep.subr.mxu0 0.0
    %356 = vmatpush1.msra.mxu0 0.0
    %357 = vmatprep.subr.mxu0 0.0
    %358 = vmatpush1.msra.mxu0 0.0
    %359 = vmatprep.subr.mxu0 0.0
    %360 = vmatpush1.msra.mxu0 0.0
    %361 = vmatprep.subr.mxu0 0.0
    %362 = vmatpush1.msra.mxu0 0.0
    %363 = vmatprep.subr.mxu0 0.0
    %364 = vmatpush1.msra.mxu0 0.0
    %365 = vmatprep.subr.mxu0 0.0
    %366 = vmatpush1.msra.mxu0 0.0
    %367 = vmatprep.subr.mxu0 0.0
    %368 = vmatpush1.msra.mxu0 0.0
    %369 = vmatprep.subr.mxu0 0.0
    %370 = vmatpush1.msra.mxu0 0.0
    %371 = vmatprep.subr.mxu0 0.0
    %372 = vmatpush1.msra.mxu0 0.0
    %373 = vmatprep.subr.mxu0 0.0
    %374 = vmatpush1.msra.mxu0 0.0
    %375 = vmatprep.subr.mxu0 0.0
    %376 = vmatpush1.msra.mxu0 0.0
    %377 = vmatprep.subr.mxu0 0.0
    %378 = vmatpush1.msra.mxu0 0.0
    %379 = vmatprep.subr.mxu0 0.0
    %380 = vmatpush1.msra.mxu0 0.0
    %381 = vmatprep.subr.mxu0 0.0
    %382 = vmatpush1.msra.mxu0 0.0
    %383 = vmatprep.subr.mxu0 0.0
    %384 = vmatpush1.msra.mxu0 0.0
    %385 = vmatprep.subr.mxu0 0.0
    %386 = vmatpush1.msra.mxu0 0.0
    %387 = vmatprep.subr.mxu0 0.0
    %388 = vmatpush1.msra.mxu0 0.0
    %389 = vmatprep.subr.mxu0 0.0
    %390 = vmatpush1.msra.mxu0 0.0
    %391 = vmatprep.subr.mxu0 0.0
    %392 = vmatpush1.msra.mxu0 0.0
    %393 = vmatprep.subr.mxu0 0.0
    %394 = vmatpush1.msra.mxu0 0.0
    %395 = vmatprep.subr.mxu0 0.0
    %396 = vmatpush1.msra.mxu0 0.0
    %397 = vmatprep.subr.mxu0 0.0
    %398 = vmatpush1.msra.mxu0 0.0
    %399 = vmatprep.subr.mxu0 0.0
    %400 = vmatpush1.msra.mxu0 0.0
    %401 = vmatprep.mubr.f32.mxu0 0.0
    %v402 = vand.u32 %v45, 4294901760
    %v403 = vsub.f32 %v45, %v402
    %v404 = vand.u32 %v403, 4294901760
    %405 = vmatmul.mubr.f32.gmra.mrb[0].mxu0 %v404
    %v406 = vpop.f32.mrb[0].mxu0
    %v407 = vadd.f32 %v326, %v406
    %v408 = vpop.f32.mrb[0].mxu0
    %409 = vdwg.mxu0
    %410 = vmatprep.subr.mxu0 0.0
    %v411 = vand.u32 %v35, 4294901760
    %v412 = vsub.f32 %v35, %v411
    %v413 = vand.u32 %v412, 4294901760
    %414 = vmatpush1.msra.mxu0 %v413
    %415 = vmatprep.subr.mxu0 0.0
    %v416 = vand.u32 %v36, 4294901760
    %v417 = vsub.f32 %v36, %v416
    %v418 = vand.u32 %v417, 4294901760
    %419 = vmatpush1.msra.mxu0 %v418
    %420 = vmatprep.subr.mxu0 0.0
    %v421 = vand.u32 %v37, 4294901760
    %v422 = vsub.f32 %v37, %v421
    %v423 = vand.u32 %v422, 4294901760
    %424 = vmatpush1.msra.mxu0 %v423
    %425 = vmatprep.subr.mxu0 0.0
    %v426 = vand.u32 %v38, 4294901760
    %v427 = vsub.f32 %v38, %v426
    %v428 = vand.u32 %v427, 4294901760
    %429 = vmatpush1.msra.mxu0 %v428
    %430 = vmatprep.subr.mxu0 0.0
    %v431 = vand.u32 %v39, 4294901760
    %v432 = vsub.f32 %v39, %v431
    %v433 = vand.u32 %v432, 4294901760
    %434 = vmatpush1.msra.mxu0 %v433
    %435 = vmatprep.subr.mxu0 0.0
    %v436 = vand.u32 %v40, 4294901760
    %v437 = vsub.f32 %v40, %v436
    %v438 = vand.u32 %v437, 4294901760
    %439 = vmatpush1.msra.mxu0 %v438
    %440 = vmatprep.subr.mxu0 0.0
    %v441 = vand.u32 %v41, 4294901760
    %v442 = vsub.f32 %v41, %v441
    %v443 = vand.u32 %v442, 4294901760
    %444 = vmatpush1.msra.mxu0 %v443
    %445 = vmatprep.subr.mxu0 0.0
    %v446 = vand.u32 %v42, 4294901760
    %v447 = vsub.f32 %v42, %v446
    %v448 = vand.u32 %v447, 4294901760
    %449 = vmatpush1.msra.mxu0 %v448
    %450 = vmatprep.subr.mxu0 0.0
    %451 = vmatpush1.msra.mxu0 0.0
    %452 = vmatprep.subr.mxu0 0.0
    %453 = vmatpush1.msra.mxu0 0.0
    %454 = vmatprep.subr.mxu0 0.0
    %455 = vmatpush1.msra.mxu0 0.0
    %456 = vmatprep.subr.mxu0 0.0
    %457 = vmatpush1.msra.mxu0 0.0
    %458 = vmatprep.subr.mxu0 0.0
    %459 = vmatpush1.msra.mxu0 0.0
    %460 = vmatprep.subr.mxu0 0.0
    %461 = vmatpush1.msra.mxu0 0.0
    %462 = vmatprep.subr.mxu0 0.0
    %463 = vmatpush1.msra.mxu0 0.0
    %464 = vmatprep.subr.mxu0 0.0
    %465 = vmatpush1.msra.mxu0 0.0
    %466 = vmatprep.subr.mxu0 0.0
    %467 = vmatpush1.msra.mxu0 0.0
    %468 = vmatprep.subr.mxu0 0.0
    %469 = vmatpush1.msra.mxu0 0.0
    %470 = vmatprep.subr.mxu0 0.0
    %471 = vmatpush1.msra.mxu0 0.0
    %472 = vmatprep.subr.mxu0 0.0
    %473 = vmatpush1.msra.mxu0 0.0
    %474 = vmatprep.subr.mxu0 0.0
    %475 = vmatpush1.msra.mxu0 0.0
    %476 = vmatprep.subr.mxu0 0.0
    %477 = vmatpush1.msra.mxu0 0.0
    %478 = vmatprep.subr.mxu0 0.0
    %479 = vmatpush1.msra.mxu0 0.0
    %480 = vmatprep.subr.mxu0 0.0
    %481 = vmatpush1.msra.mxu0 0.0
    %482 = vmatprep.subr.mxu0 0.0
    %483 = vmatpush1.msra.mxu0 0.0
    %484 = vmatprep.subr.mxu0 0.0
    %485 = vmatpush1.msra.mxu0 0.0
    %486 = vmatprep.subr.mxu0 0.0
    %487 = vmatpush1.msra.mxu0 0.0
    %488 = vmatprep.subr.mxu0 0.0
    %489 = vmatpush1.msra.mxu0 0.0
    %490 = vmatprep.subr.mxu0 0.0
    %491 = vmatpush1.msra.mxu0 0.0
    %492 = vmatprep.subr.mxu0 0.0
    %493 = vmatpush1.msra.mxu0 0.0
    %494 = vmatprep.subr.mxu0 0.0
    %495 = vmatpush1.msra.mxu0 0.0
    %496 = vmatprep.subr.mxu0 0.0
    %497 = vmatpush1.msra.mxu0 0.0
    %498 = vmatprep.mubr.f32.mxu0 0.0
    %v499 = vand.u32 %v45, 4294901760
    %500 = vmatmul.mubr.f32.gmra.mrb[0].mxu0 %v499
    %v501 = vpop.f32.mrb[0].mxu0
    %v502 = vadd.f32 %v407, %v501
    %v503 = vpop.f32.mrb[0].mxu0
    %504 = vdwg.mxu0
    %505 = vmatprep.subr.mxu0 0.0
    %v506 = vand.u32 %v35, 4294901760
    %507 = vmatpush1.msra.mxu0 %v506
    %508 = vmatprep.subr.mxu0 0.0
    %v509 = vand.u32 %v36, 4294901760
    %510 = vmatpush1.msra.mxu0 %v509
    %511 = vmatprep.subr.mxu0 0.0
    %v512 = vand.u32 %v37, 4294901760
    %513 = vmatpush1.msra.mxu0 %v512
    %514 = vmatprep.subr.mxu0 0.0
    %v515 = vand.u32 %v38, 4294901760
    %516 = vmatpush1.msra.mxu0 %v515
    %517 = vmatprep.subr.mxu0 0.0
    %v518 = vand.u32 %v39, 4294901760
    %519 = vmatpush1.msra.mxu0 %v518
    %520 = vmatprep.subr.mxu0 0.0
    %v521 = vand.u32 %v40, 4294901760
    %522 = vmatpush1.msra.mxu0 %v521
    %523 = vmatprep.subr.mxu0 0.0
    %v524 = vand.u32 %v41, 4294901760
    %525 = vmatpush1.msra.mxu0 %v524
    %526 = vmatprep.subr.mxu0 0.0
    %v527 = vand.u32 %v42, 4294901760
    %528 = vmatpush1.msra.mxu0 %v527
    %529 = vmatprep.subr.mxu0 0.0
    %530 = vmatpush1.msra.mxu0 0.0
    %531 = vmatprep.subr.mxu0 0.0
    %532 = vmatpush1.msra.mxu0 0.0
    %533 = vmatprep.subr.mxu0 0.0
    %534 = vmatpush1.msra.mxu0 0.0
    %535 = vmatprep.subr.mxu0 0.0
    %536 = vmatpush1.msra.mxu0 0.0
    %537 = vmatprep.subr.mxu0 0.0
    %538 = vmatpush1.msra.mxu0 0.0
    %539 = vmatprep.subr.mxu0 0.0
    %540 = vmatpush1.msra.mxu0 0.0
    %541 = vmatprep.subr.mxu0 0.0
    %542 = vmatpush1.msra.mxu0 0.0
    %543 = vmatprep.subr.mxu0 0.0
    %544 = vmatpush1.msra.mxu0 0.0
    %545 = vmatprep.subr.mxu0 0.0
    %546 = vmatpush1.msra.mxu0 0.0
    %547 = vmatprep.subr.mxu0 0.0
    %548 = vmatpush1.msra.mxu0 0.0
    %549 = vmatprep.subr.mxu0 0.0
    %550 = vmatpush1.msra.mxu0 0.0
    %551 = vmatprep.subr.mxu0 0.0
    %552 = vmatpush1.msra.mxu0 0.0
    %553 = vmatprep.subr.mxu0 0.0
    %554 = vmatpush1.msra.mxu0 0.0
    %555 = vmatprep.subr.mxu0 0.0
    %556 = vmatpush1.msra.mxu0 0.0
    %557 = vmatprep.subr.mxu0 0.0
    %558 = vmatpush1.msra.mxu0 0.0
    %559 = vmatprep.subr.mxu0 0.0
    %560 = vmatpush1.msra.mxu0 0.0
    %561 = vmatprep.subr.mxu0 0.0
    %562 = vmatpush1.msra.mxu0 0.0
    %563 = vmatprep.subr.mxu0 0.0
    %564 = vmatpush1.msra.mxu0 0.0
    %565 = vmatprep.subr.mxu0 0.0
    %566 = vmatpush1.msra.mxu0 0.0
    %567 = vmatprep.subr.mxu0 0.0
    %568 = vmatpush1.msra.mxu0 0.0
    %569 = vmatprep.subr.mxu0 0.0
    %570 = vmatpush1.msra.mxu0 0.0
    %571 = vmatprep.subr.mxu0 0.0
    %572 = vmatpush1.msra.mxu0 0.0
    %573 = vmatprep.subr.mxu0 0.0
    %574 = vmatpush1.msra.mxu0 0.0
    %575 = vmatprep.subr.mxu0 0.0
    %576 = vmatpush1.msra.mxu0 0.0
    %577 = vmatprep.mubr.f32.mxu0 0.0
    %v578 = vand.u32 %v45, 4294901760
    %579 = vmatmul.mubr.f32.gmra.mrb[0].mxu0 %v578
    %v580 = vpop.f32.mrb[0].mxu0
    %v581 = vadd.f32 %v502, %v580
    %v582 = vpop.f32.mrb[0].mxu0
    %583 = vdwg.mxu0
    %584 = vst [vmem:[#allocation5] sm:$0xff] %v581
    // Predicated region
    $region14: #{tpu_custom_call.1} parent=1 // pred_check
      _
    $region15: #{tpu_custom_call.1} parent=1 // pred_check_branch
      %586 = sbr.rel (0) target = $region17
    $region16: #{tpu_custom_call.1} parent=1 // pred_region
      %s588 = ssub.s32 128, 128
      %589 = vsyncadd [#allocation4], %s588
      %s591 = sshll.u32 [#allocation5], 4
      %s592 = int_to_ptr.vmem [resolvable:$true] %s591
      %594 = dma.vmem_to_hbm [thread:$0]  %s592, 128, %s2, [#allocation4]
    $region17: #{tpu_custom_call.1} parent=1 // pred_fallthru
      _
    // Predicated region
    $region18: #{tpu_custom_call.1} parent=1 // pred_check
      _
    $region19: #{tpu_custom_call.1} parent=1 // pred_check_branch
      %596 = sbr.rel (0) target = $region21
    $region20: #{tpu_custom_call.1} parent=1 // pred_region
      %597 = dma.done [#allocation4], 128
    $region21: #{tpu_custom_call.1} parent=1 // pred_fallthru
      _
    %598 = vsyncpa [#allocation3], 1
    %599 = vsyncpa [#allocation4], 1

</llo_original>
